<compile_context>
chip_gen: v7x
topology: tpu7x:2x2x1
jax: 0.10.0
libtpu: 0.0.40
codegen_flags: <defaults>
</compile_context>

<pallas_src>
import functools
import math

import jax
import jax.numpy as jnp
from jax.experimental import pallas as pl
from jax.experimental.pallas import tpu as pltpu


def _main_encoder_kernel(x1_ref, xd_ref, w1_ref, b1_ref, w2_ref, b2_ref,
                         g1_ref, g2_ref, bt1_ref, bt2_ref, out_ref, *,
                         eps: float, y_dim: int, mxu_dtype):
    # x1_ref : (S, TB, Y)  input dtype (f32 or bf16) — seq-major cell_encoder out
    # xd_ref : (TB, D)     input dtype
    # w1_ref : (D, Y), w2_ref: (Y, Y)   in mxu_dtype
    # b1_ref, b2_ref : (1, Y) f32
    # g1/g2/bt1/bt2  : (1, Y) f32  — LayerNorm affine, pre-split halves
    # out_ref: (TB, 2Y) f32

    # --- y1 = max over the sequence dim --------------------------------
    # Leading (untiled) axis reduce == S-1 elementwise maxima on (TB, Y)
    # vregs (VPU); no cross-sublane relayout.  Cast to f32 after the max.
    y1 = jnp.max(x1_ref[...], axis=0).astype(jnp.float32)            # (TB, Y)

    # --- y2 = feed2(GELU_tanh(feed1(x_d)))  (MXU, f32 accumulation) -----
    xd = xd_ref[...].astype(mxu_dtype)
    h = jnp.dot(xd, w1_ref[...],
                preferred_element_type=jnp.float32) + b1_ref[...]    # (TB, Y)
    c = math.sqrt(2.0 / math.pi)
    h = 0.5 * h * (1.0 + jnp.tanh(c * (h + 0.044715 * (h * h * h))))  # EUP tanh
    y2 = jnp.dot(h.astype(mxu_dtype), w2_ref[...],
                 preferred_element_type=jnp.float32) + b2_ref[...]   # (TB, Y)

    # --- LayerNorm over the (virtual) concat [y1, y2] -------------------
    # sum / sum-of-squares form: 4 independent lane reduces (shorter XLU
    # critical path than the two-pass (y - mean) form).
    inv_n = 1.0 / (2.0 * y_dim)
    s1 = jnp.sum(y1, axis=-1, keepdims=True)
    s2 = jnp.sum(y2, axis=-1, keepdims=True)
    q1 = jnp.sum(y1 * y1, axis=-1, keepdims=True)
    q2 = jnp.sum(y2 * y2, axis=-1, keepdims=True)
    mean = (s1 + s2) * inv_n                                          # (TB, 1)
    var = (q1 + q2) * inv_n - mean * mean                             # (TB, 1)
    inv_std = jax.lax.rsqrt(var + eps)                                # EUP

    # Lane-dense stores: two 128-aligned halves of the (TB, 2Y) output tile.
    out_ref[:, :y_dim] = (y1 - mean) * inv_std * g1_ref[...] + bt1_ref[...]
    out_ref[:, y_dim:] = (y2 - mean) * inv_std * g2_ref[...] + bt2_ref[...]
    # TODO(synk): dropout is identity here (eval mode); training-mode dropout
    # would use pltpu.prng_seed / pltpu.stateful_bernoulli in this kernel.


def _pick_tile_b(B, S, Y, D, x1_itemsize, vmem_budget=12 * 1024 * 1024):
    """Largest batch tile under a conservative VMEM budget (safe on v5e/v6e/v7x
    scoped defaults), rounded to sublane multiples, with >=2 grid steps when
    the batch allows (so v7x's second TensorCore is not idle)."""
    resident = (D * Y + Y * Y + 8 * Y) * 4                 # weights/bias/affine (f32 bound)
    per_row = 2 * (S * Y * x1_itemsize + D * 4 + 2 * Y * 4)  # double-buffered tiled operands
    cap = max(8, (vmem_budget - resident) // per_row)
    t = int(min(512, cap, B))
    if t >= B:
        if B >= 16:
            t = ((B + 1) // 2 + 7) // 8 * 8                # ~B/2, multiple of 8
            t = min(t, B)
        else:
            t = B                                          # tiny batch: single full tile
    else:
        t = max(8, (t // 8) * 8)
    return t


def main_encoder_forward(x1, x_d, w1, b1, w2, b2, gamma, beta, *,
                         eps: float = 1e-5, tile_b: int | None = None,
                         mxu_dtype=None, x1_seq_major: bool = True):
    """Fused Main_Encoder forward.

    x1 : cell_encoder output. Preferred layout is seq-major (S, B, Y)
         (x1_seq_major=True) so the sequence max is pure elementwise VPU work.
         With x1_seq_major=False a (B, S, Y) input is accepted via a one-time
         transpose.
    x_d: (B, D).  Returns (B, 2Y) float32.
    """
    if not x1_seq_major:
        # TODO(synk): one-time HBM transpose copy; prefer the producer
        # (cell_encoder) emitting seq-major output, or fusing the seq-max
        # into it entirely (S-fold reduction of the dominant HBM traffic).
        x1 = jnp.moveaxis(x1, 1, 0)

    S, B, Y = x1.shape
    D = x_d.shape[1]
    assert x_d.shape[0] == B
    assert w1.shape == (D, Y) and w2.shape == (Y, Y)
    assert b1.shape == (Y,) and b2.shape == (Y,)
    assert gamma.shape == (2 * Y,) and beta.shape == (2 * Y,)

    if tile_b is None:
        tile_b = _pick_tile_b(B, S, Y, D, jnp.dtype(x1.dtype).itemsize)
    n_tiles = pl.cdiv(B, tile_b)
    B_pad = n_tiles * tile_b   # output buffer only; inputs stay un-padded.

    # bf16 MXU operands (f32 accumulation) once the tile is big enough to
    # actually fill the MXU; f32 otherwise (and as the exact-semantics path).
    if mxu_dtype is None:
        mxu_dtype = jnp.bfloat16 if tile_b >= 256 else jnp.float32
    mxu_dtype = jnp.dtype(mxu_dtype)

    w1c = w1.astype(mxu_dtype)
    w2c = w2.astype(mxu_dtype)
    b1_2d = b1.reshape(1, Y).astype(jnp.float32)
    b2_2d = b2.reshape(1, Y).astype(jnp.float32)
    gamma_f = gamma.astype(jnp.float32)
    beta_f = beta.astype(jnp.float32)
    g1 = gamma_f[:Y].reshape(1, Y)
    g2 = gamma_f[Y:].reshape(1, Y)
    bt1 = beta_f[:Y].reshape(1, Y)
    bt2 = beta_f[Y:].reshape(1, Y)

    kernel = functools.partial(_main_encoder_kernel, eps=eps, y_dim=Y,
                               mxu_dtype=mxu_dtype)

    const = lambda i: (0, 0)
    out = pl.pallas_call(
        kernel,
        out_shape=jax.ShapeDtypeStruct((B_pad, 2 * Y), jnp.float32),
        grid_spec=pltpu.PrefetchScalarGridSpec(
            num_scalar_prefetch=0,
            grid=(n_tiles,),
            in_specs=[
                pl.BlockSpec((S, tile_b, Y), lambda i: (0, i, 0)),  # x1 (seq-major)
                pl.BlockSpec((tile_b, D), lambda i: (i, 0)),        # x_d tile
                pl.BlockSpec((D, Y), const),                        # w1 (resident)
                pl.BlockSpec((1, Y), const),                        # b1
                pl.BlockSpec((Y, Y), const),                        # w2 (resident)
                pl.BlockSpec((1, Y), const),                        # b2
                pl.BlockSpec((1, Y), const),                        # gamma half 1
                pl.BlockSpec((1, Y), const),                        # gamma half 2
                pl.BlockSpec((1, Y), const),                        # beta half 1
                pl.BlockSpec((1, Y), const),                        # beta half 2
            ],
            out_specs=pl.BlockSpec((tile_b, 2 * Y), lambda i: (i, 0)),
        ),
        compiler_params=pltpu.CompilerParams(
            dimension_semantics=("parallel",)),
    )(x1, x_d, w1c, b1_2d, w2c, b2_2d, g1, g2, bt1, bt2)

    return out if B_pad == B else out[:B]


def _reference(x1_sby, x_d, w1, b1, w2, b2, gamma, beta, eps=1e-5,
               mxu_dtype=jnp.float32):
    f32 = jnp.float32
    y1 = jnp.max(x1_sby.astype(f32), axis=0)
    h = jnp.dot(x_d.astype(mxu_dtype), w1.astype(mxu_dtype),
                preferred_element_type=f32) + b1
    c = math.sqrt(2.0 / math.pi)
    h = 0.5 * h * (1.0 + jnp.tanh(c * (h + 0.044715 * h ** 3)))
    y2 = jnp.dot(h.astype(mxu_dtype), w2.astype(mxu_dtype),
                 preferred_element_type=f32) + b2
    y = jnp.concatenate([y1, y2], axis=1)
    mean = y.mean(-1, keepdims=True)
    var = ((y - mean) ** 2).mean(-1, keepdims=True)
    return (y - mean) / jnp.sqrt(var + eps) * gamma + beta


if __name__ == "__main__":
    # Small shapes consistent with Main_Encoder's forward:
    #   d_dim (D) = 32, y_dim (Y) = 128, genes/sequence (S) = 8, batch (B) = 2.
    B, S, D, Y = 2, 8, 32, 128

    key = jax.random.PRNGKey(0)
    ks = jax.random.split(key, 10)

    # cell_encoder is an external module not defined in the spec; the kernel
    # consumes its output directly, produced here seq-major (S, B, Y).
    x1 = jax.random.normal(ks[0], (S, B, Y), dtype=jnp.float32)
    x_d = jax.random.normal(ks[1], (B, D), dtype=jnp.float32)

    w1 = jax.random.normal(ks[2], (D, Y), dtype=jnp.float32) * 0.1
    b1 = jax.random.normal(ks[3], (Y,), dtype=jnp.float32) * 0.1
    w2 = jax.random.normal(ks[4], (Y, Y), dtype=jnp.float32) * 0.1
    b2 = jax.random.normal(ks[5], (Y,), dtype=jnp.float32) * 0.1
    gamma = 1.0 + 0.1 * jax.random.normal(ks[6], (2 * Y,), dtype=jnp.float32)
    beta = 0.1 * jax.random.normal(ks[7], (2 * Y,), dtype=jnp.float32)

    # --- check 1: tiny batch, all-f32 path, exact module semantics ----------
    out = main_encoder_forward(x1, x_d, w1, b1, w2, b2, gamma, beta)
    out = jax.block_until_ready(out)
    ref = _reference(x1, x_d, w1, b1, w2, b2, gamma, beta)
    assert out.shape == (B, 2 * Y)
    assert jnp.allclose(out, ref, atol=1e-4, rtol=1e-4), "f32 path mismatch"

    # --- check 2: larger batch exercising the optimized path ---------------
    # bf16 x1 in HBM (no wrapper cast/pad), 256-row tiles, 2 grid steps,
    # bf16 MXU operands with f32 accumulation.
    B2 = 512
    x1b = jax.random.normal(ks[8], (S, B2, Y), dtype=jnp.float32).astype(jnp.bfloat16)
    xdb = jax.random.normal(ks[9], (B2, D), dtype=jnp.float32)
    out2 = main_encoder_forward(x1b, xdb, w1, b1, w2, b2, gamma, beta)
    out2 = jax.block_until_ready(out2)
    ref2 = _reference(x1b, xdb, w1, b1, w2, b2, gamma, beta,
                      mxu_dtype=jnp.bfloat16)
    assert out2.shape == (B2, 2 * Y)
    assert jnp.allclose(out2, ref2, atol=1e-2, rtol=1e-2), "bf16 path mismatch"

    print("KERNEL_OK")
</pallas_src>

<mosaic_0001>
module attributes {stable_mosaic.version = 11 : i64} {
  func.func @_main_encoder_kernel(%arg0: i32, %arg1: memref<8x2x128xf32, #tpu.memory_space<vmem>>, %arg2: memref<2x32xf32, #tpu.memory_space<vmem>>, %arg3: memref<32x128xf32, #tpu.memory_space<vmem>>, %arg4: memref<1x128xf32, #tpu.memory_space<vmem>>, %arg5: memref<128x128xf32, #tpu.memory_space<vmem>>, %arg6: memref<1x128xf32, #tpu.memory_space<vmem>>, %arg7: memref<1x128xf32, #tpu.memory_space<vmem>>, %arg8: memref<1x128xf32, #tpu.memory_space<vmem>>, %arg9: memref<1x128xf32, #tpu.memory_space<vmem>>, %arg10: memref<1x128xf32, #tpu.memory_space<vmem>>, %arg11: memref<2x256xf32, #tpu.memory_space<vmem>>) attributes {dimension_semantics = [#tpu.dimension_semantics<parallel>], iteration_bounds = array<i64: 1>, scalar_prefetch = 0 : i64, scratch_operands = 0 : i64, tpu.core_type = #tpu.core_type<tc>, window_params = [{transform_indices = @transform_0, window_bounds = array<i64: 8, 2, 128>}, {transform_indices = @transform_1, window_bounds = array<i64: 2, 32>}, {pipeline_mode = #tpu.pipeline_mode<synchronous>, transform_indices = @transform_2, window_bounds = array<i64: 32, 128>}, {pipeline_mode = #tpu.pipeline_mode<synchronous>, transform_indices = @transform_3, window_bounds = array<i64: 1, 128>}, {pipeline_mode = #tpu.pipeline_mode<synchronous>, transform_indices = @transform_4, window_bounds = array<i64: 128, 128>}, {pipeline_mode = #tpu.pipeline_mode<synchronous>, transform_indices = @transform_5, window_bounds = array<i64: 1, 128>}, {pipeline_mode = #tpu.pipeline_mode<synchronous>, transform_indices = @transform_6, window_bounds = array<i64: 1, 128>}, {pipeline_mode = #tpu.pipeline_mode<synchronous>, transform_indices = @transform_7, window_bounds = array<i64: 1, 128>}, {pipeline_mode = #tpu.pipeline_mode<synchronous>, transform_indices = @transform_8, window_bounds = array<i64: 1, 128>}, {pipeline_mode = #tpu.pipeline_mode<synchronous>, transform_indices = @transform_9, window_bounds = array<i64: 1, 128>}, {transform_indices = @transform_10, window_bounds = array<i64: 2, 256>}]} {
    %c0 = arith.constant 0 : index
    %c0_0 = arith.constant 0 : index
    %c0_1 = arith.constant 0 : index
    %0 = vector.load %arg1[%c0, %c0_0, %c0_1] : memref<8x2x128xf32, #tpu.memory_space<vmem>>, vector<8x2x128xf32>
    %cst = arith.constant dense<0xFF800000> : vector<2x128xf32>
    %1 = vector.multi_reduction <maximumf>, %0, %cst [0] : vector<8x2x128xf32> to vector<2x128xf32>
    %c0_2 = arith.constant 0 : index
    %c0_3 = arith.constant 0 : index
    %2 = vector.load %arg2[%c0_2, %c0_3] : memref<2x32xf32, #tpu.memory_space<vmem>>, vector<2x32xf32>
    %c0_4 = arith.constant 0 : index
    %c0_5 = arith.constant 0 : index
    %3 = vector.load %arg3[%c0_4, %c0_5] : memref<32x128xf32, #tpu.memory_space<vmem>>, vector<32x128xf32>
    %cst_6 = arith.constant dense<0.000000e+00> : vector<2x128xf32>
    %4 = tpu.matmul %2, %3, %cst_6 {dimension_numbers = #tpu.dot_dimension_numbers<[1], [0], [0], [1], [0, 0, 1, 1], [], []>} : vector<2x32xf32>, vector<32x128xf32>, vector<2x128xf32> -> vector<2x128xf32>
    %c0_7 = arith.constant 0 : index
    %c0_8 = arith.constant 0 : index
    %5 = vector.load %arg4[%c0_7, %c0_8] : memref<1x128xf32, #tpu.memory_space<vmem>>, vector<1x128xf32>
    %6 = vector.broadcast %5 : vector<1x128xf32> to vector<2x128xf32>
    %7 = arith.addf %4, %6 : vector<2x128xf32>
    %cst_9 = arith.constant 5.000000e-01 : f32
    %8 = vector.broadcast %cst_9 : f32 to vector<2x128xf32>
    %9 = arith.mulf %8, %7 : vector<2x128xf32>
    %10 = arith.mulf %7, %7 : vector<2x128xf32>
    %11 = arith.mulf %10, %7 : vector<2x128xf32>
    %cst_10 = arith.constant 4.471500e-02 : f32
    %12 = vector.broadcast %cst_10 : f32 to vector<2x128xf32>
    %13 = arith.mulf %12, %11 : vector<2x128xf32>
    %14 = arith.addf %7, %13 : vector<2x128xf32>
    %cst_11 = arith.constant 0.797884583 : f32
    %15 = vector.broadcast %cst_11 : f32 to vector<2x128xf32>
    %16 = arith.mulf %15, %14 : vector<2x128xf32>
    %17 = math.tanh %16 : vector<2x128xf32>
    %cst_12 = arith.constant 1.000000e+00 : f32
    %18 = vector.broadcast %cst_12 : f32 to vector<2x128xf32>
    %19 = arith.addf %18, %17 : vector<2x128xf32>
    %20 = arith.mulf %9, %19 : vector<2x128xf32>
    %c0_13 = arith.constant 0 : index
    %c0_14 = arith.constant 0 : index
    %21 = vector.load %arg5[%c0_13, %c0_14] : memref<128x128xf32, #tpu.memory_space<vmem>>, vector<128x128xf32>
    %cst_15 = arith.constant dense<0.000000e+00> : vector<2x128xf32>
    %22 = tpu.matmul %20, %21, %cst_15 {dimension_numbers = #tpu.dot_dimension_numbers<[1], [0], [0], [1], [0, 0, 1, 1], [], []>} : vector<2x128xf32>, vector<128x128xf32>, vector<2x128xf32> -> vector<2x128xf32>
    %c0_16 = arith.constant 0 : index
    %c0_17 = arith.constant 0 : index
    %23 = vector.load %arg6[%c0_16, %c0_17] : memref<1x128xf32, #tpu.memory_space<vmem>>, vector<1x128xf32>
    %24 = vector.broadcast %23 : vector<1x128xf32> to vector<2x128xf32>
    %25 = arith.addf %22, %24 : vector<2x128xf32>
    %cst_18 = arith.constant dense<0.000000e+00> : vector<2xf32>
    %26 = vector.multi_reduction <add>, %1, %cst_18 [1] : vector<2x128xf32> to vector<2xf32>
    %27 = vector.shape_cast %26 : vector<2xf32> to vector<2x1xf32>
    %cst_19 = arith.constant dense<0.000000e+00> : vector<2xf32>
    %28 = vector.multi_reduction <add>, %25, %cst_19 [1] : vector<2x128xf32> to vector<2xf32>
    %29 = vector.shape_cast %28 : vector<2xf32> to vector<2x1xf32>
    %30 = arith.mulf %1, %1 : vector<2x128xf32>
    %cst_20 = arith.constant dense<0.000000e+00> : vector<2xf32>
    %31 = vector.multi_reduction <add>, %30, %cst_20 [1] : vector<2x128xf32> to vector<2xf32>
    %32 = vector.shape_cast %31 : vector<2xf32> to vector<2x1xf32>
    %33 = arith.mulf %25, %25 : vector<2x128xf32>
    %cst_21 = arith.constant dense<0.000000e+00> : vector<2xf32>
    %34 = vector.multi_reduction <add>, %33, %cst_21 [1] : vector<2x128xf32> to vector<2xf32>
    %35 = vector.shape_cast %34 : vector<2xf32> to vector<2x1xf32>
    %36 = arith.addf %27, %29 : vector<2x1xf32>
    %cst_22 = arith.constant 3.906250e-03 : f32
    %37 = vector.broadcast %cst_22 : f32 to vector<2x1xf32>
    %38 = arith.mulf %36, %37 : vector<2x1xf32>
    %39 = arith.addf %32, %35 : vector<2x1xf32>
    %cst_23 = arith.constant 3.906250e-03 : f32
    %40 = vector.broadcast %cst_23 : f32 to vector<2x1xf32>
    %41 = arith.mulf %39, %40 : vector<2x1xf32>
    %42 = arith.mulf %38, %38 : vector<2x1xf32>
    %43 = arith.subf %41, %42 : vector<2x1xf32>
    %cst_24 = arith.constant 9.99999974E-6 : f32
    %44 = vector.broadcast %cst_24 : f32 to vector<2x1xf32>
    %45 = arith.addf %43, %44 : vector<2x1xf32>
    %46 = math.rsqrt %45 : vector<2x1xf32>
    %47 = vector.broadcast %38 : vector<2x1xf32> to vector<2x128xf32>
    %48 = arith.subf %1, %47 : vector<2x128xf32>
    %49 = vector.broadcast %46 : vector<2x1xf32> to vector<2x128xf32>
    %50 = arith.mulf %48, %49 : vector<2x128xf32>
    %c0_25 = arith.constant 0 : index
    %c0_26 = arith.constant 0 : index
    %51 = vector.load %arg7[%c0_25, %c0_26] : memref<1x128xf32, #tpu.memory_space<vmem>>, vector<1x128xf32>
    %52 = vector.broadcast %51 : vector<1x128xf32> to vector<2x128xf32>
    %53 = arith.mulf %50, %52 : vector<2x128xf32>
    %c0_27 = arith.constant 0 : index
    %c0_28 = arith.constant 0 : index
    %54 = vector.load %arg9[%c0_27, %c0_28] : memref<1x128xf32, #tpu.memory_space<vmem>>, vector<1x128xf32>
    %55 = vector.broadcast %54 : vector<1x128xf32> to vector<2x128xf32>
    %56 = arith.addf %53, %55 : vector<2x128xf32>
    %c0_29 = arith.constant 0 : index
    %c0_30 = arith.constant 0 : index
    %57 = vector.load %arg11[%c0_29, %c0_30] : memref<2x256xf32, #tpu.memory_space<vmem>>, vector<2x128xf32>
    tpu.vector_store %arg11[%c0_29, %c0_30], %56 {strides = array<i32>} : memref<2x256xf32, #tpu.memory_space<vmem>>, vector<2x128xf32>,
    %58 = vector.broadcast %38 : vector<2x1xf32> to vector<2x128xf32>
    %59 = arith.subf %25, %58 : vector<2x128xf32>
    %60 = vector.broadcast %46 : vector<2x1xf32> to vector<2x128xf32>
    %61 = arith.mulf %59, %60 : vector<2x128xf32>
    %c0_31 = arith.constant 0 : index
    %c0_32 = arith.constant 0 : index
    %62 = vector.load %arg8[%c0_31, %c0_32] : memref<1x128xf32, #tpu.memory_space<vmem>>, vector<1x128xf32>
    %63 = vector.broadcast %62 : vector<1x128xf32> to vector<2x128xf32>
    %64 = arith.mulf %61, %63 : vector<2x128xf32>
    %c0_33 = arith.constant 0 : index
    %c0_34 = arith.constant 0 : index
    %65 = vector.load %arg10[%c0_33, %c0_34] : memref<1x128xf32, #tpu.memory_space<vmem>>, vector<1x128xf32>
    %66 = vector.broadcast %65 : vector<1x128xf32> to vector<2x128xf32>
    %67 = arith.addf %64, %66 : vector<2x128xf32>
    %c0_35 = arith.constant 0 : index
    %c128 = arith.constant 128 : index
    %68 = vector.load %arg11[%c0_35, %c128] : memref<2x256xf32, #tpu.memory_space<vmem>>, vector<2x128xf32>
    tpu.vector_store %arg11[%c0_35, %c128], %67 {strides = array<i32>} : memref<2x256xf32, #tpu.memory_space<vmem>>, vector<2x128xf32>,
    return
  }
  func.func @transform_0(%arg0: i32) -> (i32, i32, i32) {
    %c0_i32 = arith.constant 0 : i32
    %c0_i32_0 = arith.constant 0 : i32
    %c0_i32_1 = arith.constant 0 : i32
    return %c0_i32, %arg0, %c0_i32_0 : i32, i32, i32
  }
  func.func @transform_1(%arg0: i32) -> (i32, i32) {
    %c0_i32 = arith.constant 0 : i32
    %c0_i32_0 = arith.constant 0 : i32
    return %arg0, %c0_i32 : i32, i32
  }
  func.func @transform_2(%arg0: i32) -> (i32, i32) {
    %c0_i32 = arith.constant 0 : i32
    %c0_i32_0 = arith.constant 0 : i32
    %c0_i32_1 = arith.constant 0 : i32
    return %c0_i32, %c0_i32_0 : i32, i32
  }
  func.func @transform_3(%arg0: i32) -> (i32, i32) {
    %c0_i32 = arith.constant 0 : i32
    %c0_i32_0 = arith.constant 0 : i32
    %c0_i32_1 = arith.constant 0 : i32
    return %c0_i32, %c0_i32_0 : i32, i32
  }
  func.func @transform_4(%arg0: i32) -> (i32, i32) {
    %c0_i32 = arith.constant 0 : i32
    %c0_i32_0 = arith.constant 0 : i32
    %c0_i32_1 = arith.constant 0 : i32
    return %c0_i32, %c0_i32_0 : i32, i32
  }
  func.func @transform_5(%arg0: i32) -> (i32, i32) {
    %c0_i32 = arith.constant 0 : i32
    %c0_i32_0 = arith.constant 0 : i32
    %c0_i32_1 = arith.constant 0 : i32
    return %c0_i32, %c0_i32_0 : i32, i32
  }
  func.func @transform_6(%arg0: i32) -> (i32, i32) {
    %c0_i32 = arith.constant 0 : i32
    %c0_i32_0 = arith.constant 0 : i32
    %c0_i32_1 = arith.constant 0 : i32
    return %c0_i32, %c0_i32_0 : i32, i32
  }
  func.func @transform_7(%arg0: i32) -> (i32, i32) {
    %c0_i32 = arith.constant 0 : i32
    %c0_i32_0 = arith.constant 0 : i32
    %c0_i32_1 = arith.constant 0 : i32
    return %c0_i32, %c0_i32_0 : i32, i32
  }
  func.func @transform_8(%arg0: i32) -> (i32, i32) {
    %c0_i32 = arith.constant 0 : i32
    %c0_i32_0 = arith.constant 0 : i32
    %c0_i32_1 = arith.constant 0 : i32
    return %c0_i32, %c0_i32_0 : i32, i32
  }
  func.func @transform_9(%arg0: i32) -> (i32, i32) {
    %c0_i32 = arith.constant 0 : i32
    %c0_i32_0 = arith.constant 0 : i32
    %c0_i32_1 = arith.constant 0 : i32
    return %c0_i32, %c0_i32_0 : i32, i32
  }
  func.func @transform_10(%arg0: i32) -> (i32, i32) {
    %c0_i32 = arith.constant 0 : i32
    %c0_i32_0 = arith.constant 0 : i32
    return %arg0, %c0_i32 : i32, i32
  }
}

</mosaic_0001>

<llo_original>
// kernel: tpu_custom_call.1
$region0: #{tpu_custom_call.1}
  #allocation0 [shape = 'u32[]', space=smem, size = 0x4, offset = 0x4, fixed_abs, tag = 'smem constant byte address 0x4 - core index']
  #allocation1 [shape = 'u32[144,128]{1,0:T(1,128)}', space=vmem, size = 0x12000, scoped, tag = 'internal scratch']
  %s0 = inlined_call_operand.hbm [shape: f32[8,2,128], index: 0, kind: input, shape index: {}]
  %s1 = inlined_call_operand.vmem [shape: f32[2,32], index: 1, kind: input, shape index: {}]
  %s2 = inlined_call_operand.hbm [shape: f32[32,128], index: 2, kind: input, shape index: {}]
  %s3 = inlined_call_operand.vmem [shape: f32[1,128], index: 3, kind: input, shape index: {}]
  %s4 = inlined_call_operand.hbm [shape: f32[128,128], index: 4, kind: input, shape index: {}]
  %s5 = inlined_call_operand.vmem [shape: f32[1,128], index: 5, kind: input, shape index: {}]
  %s6 = inlined_call_operand.vmem [shape: f32[1,128], index: 6, kind: input, shape index: {}]
  %s7 = inlined_call_operand.vmem [shape: f32[1,128], index: 7, kind: input, shape index: {}]
  %s8 = inlined_call_operand.vmem [shape: f32[1,128], index: 8, kind: input, shape index: {}]
  %s9 = inlined_call_operand.vmem [shape: f32[1,128], index: 9, kind: input, shape index: {}]
  %s10 = inlined_call_operand.hbm [shape: f32[2,256], index: 10, kind: output, shape index: {}]
  %s11 = sld [smem:[#allocation0]]
  $region62: #{tpu_custom_call.1} parent=0
    _
  %s13 = ssub.s32 1, %s11
  %s14 = scalar_select 0, %s13, %s11
  $region1: #{tpu_custom_call.1} parent=0
    #allocation2 [shape = 'u8[8192]{0}', space=vmem, size = 0x2000, scoped, tag = 'input window, operand 0, single buffered']
    #allocation3 [shape = 's32[1]{0}', space=sflag, size = 0x4, scoped, tag = 'scoped memory for tpu_custom_call.1']
    #allocation4 [shape = 's32[1]{0}', space=sflag, size = 0x4, scoped, tag = 'scoped memory for tpu_custom_call.1']
    #allocation5 [shape = 'u8[16384]{0}', space=vmem, size = 0x4000, scoped, tag = 'input window, operand 2, single buffered']
    #allocation6 [shape = 's32[1]{0}', space=sflag, size = 0x4, scoped, tag = 'scoped memory for tpu_custom_call.1']
    #allocation7 [shape = 'u8[65536]{0}', space=vmem, size = 0x10000, scoped, tag = 'input window, operand 4, single buffered']
    #allocation8 [shape = 'u8[2048]{0}', space=vmem, size = 0x800, scoped, tag = 'output window, operand 0, single buffered']
    %15 = vsyncpa [#allocation3], 0
    %16 = vsyncpa [#allocation6], 0
    %17 = vsyncpa [#allocation4], 0
    // Predicated region
    $region2: #{tpu_custom_call.1} parent=1 // pred_check
      _
    $region3: #{tpu_custom_call.1} parent=1 // pred_check_branch
      %19 = sbr.rel (0) target = $region5
    $region4: #{tpu_custom_call.1} parent=1 // pred_region
      %s21 = ssub.s32 256, 256
      %22 = vsyncadd [#allocation3], %s21
      %s23 = sshll.u32 [#allocation2], 4
      %s24 = int_to_ptr.vmem [resolvable:$true] %s23
      %29 = dma.hbm_to_vmem [thread:$0]  %s0, 256, %s24, [#allocation3], 32, 32, 2
    $region5: #{tpu_custom_call.1} parent=1 // pred_fallthru
      _
    // Predicated region
    $region6: #{tpu_custom_call.1} parent=1 // pred_check
      _
    $region7: #{tpu_custom_call.1} parent=1 // pred_check_branch
      %31 = sbr.rel (0) target = $region9
    $region8: #{tpu_custom_call.1} parent=1 // pred_region
      _
    $region9: #{tpu_custom_call.1} parent=1 // pred_fallthru
      _
    // Predicated region
    $region10: #{tpu_custom_call.1} parent=1 // pred_check
      _
    $region11: #{tpu_custom_call.1} parent=1 // pred_check_branch
      %33 = sbr.rel (0) target = $region13
    $region12: #{tpu_custom_call.1} parent=1 // pred_region
      %s35 = ssub.s32 512, 512
      %36 = vsyncadd [#allocation6], %s35
      %s37 = sshll.u32 [#allocation5], 4
      %s38 = int_to_ptr.vmem [resolvable:$true] %s37
      %43 = dma.hbm_to_vmem [thread:$0]  %s2, 512, %s38, [#allocation6], 128, 128, 8
    $region13: #{tpu_custom_call.1} parent=1 // pred_fallthru
      _
    // Predicated region
    $region14: #{tpu_custom_call.1} parent=1 // pred_check
      _
    $region15: #{tpu_custom_call.1} parent=1 // pred_check_branch
      %45 = sbr.rel (0) target = $region17
    $region16: #{tpu_custom_call.1} parent=1 // pred_region
      _
    $region17: #{tpu_custom_call.1} parent=1 // pred_fallthru
      _
    // Predicated region
    $region18: #{tpu_custom_call.1} parent=1 // pred_check
      _
    $region19: #{tpu_custom_call.1} parent=1 // pred_check_branch
      %47 = sbr.rel (0) target = $region21
    $region20: #{tpu_custom_call.1} parent=1 // pred_region
      %s49 = ssub.s32 2048, 2048
      %50 = vsyncadd [#allocation6], %s49
      %s51 = sshll.u32 [#allocation7], 4
      %s52 = int_to_ptr.vmem [resolvable:$true] %s51
      %57 = dma.hbm_to_vmem [thread:$0]  %s4, 2048, %s52, [#allocation6], 128, 128, 8
    $region21: #{tpu_custom_call.1} parent=1 // pred_fallthru
      _
    // Predicated region
    $region22: #{tpu_custom_call.1} parent=1 // pred_check
      _
    $region23: #{tpu_custom_call.1} parent=1 // pred_check_branch
      %59 = sbr.rel (0) target = $region25
    $region24: #{tpu_custom_call.1} parent=1 // pred_region
      _
    $region25: #{tpu_custom_call.1} parent=1 // pred_fallthru
      _
    // Predicated region
    $region26: #{tpu_custom_call.1} parent=1 // pred_check
      _
    $region27: #{tpu_custom_call.1} parent=1 // pred_check_branch
      %61 = sbr.rel (0) target = $region29
    $region28: #{tpu_custom_call.1} parent=1 // pred_region
      _
    $region29: #{tpu_custom_call.1} parent=1 // pred_fallthru
      _
    // Predicated region
    $region30: #{tpu_custom_call.1} parent=1 // pred_check
      _
    $region31: #{tpu_custom_call.1} parent=1 // pred_check_branch
      %63 = sbr.rel (0) target = $region33
    $region32: #{tpu_custom_call.1} parent=1 // pred_region
      _
    $region33: #{tpu_custom_call.1} parent=1 // pred_fallthru
      _
    // Predicated region
    $region34: #{tpu_custom_call.1} parent=1 // pred_check
      _
    $region35: #{tpu_custom_call.1} parent=1 // pred_check_branch
      %65 = sbr.rel (0) target = $region37
    $region36: #{tpu_custom_call.1} parent=1 // pred_region
      _
    $region37: #{tpu_custom_call.1} parent=1 // pred_fallthru
      _
    // Predicated region
    $region38: #{tpu_custom_call.1} parent=1 // pred_check
      _
    $region39: #{tpu_custom_call.1} parent=1 // pred_check_branch
      %67 = sbr.rel (0) target = $region41
    $region40: #{tpu_custom_call.1} parent=1 // pred_region
      _
    $region41: #{tpu_custom_call.1} parent=1 // pred_fallthru
      _
    // Predicated region
    $region42: #{tpu_custom_call.1} parent=1 // pred_check
      _
    $region43: #{tpu_custom_call.1} parent=1 // pred_check_branch
      %69 = sbr.rel (0) target = $region45
    $region44: #{tpu_custom_call.1} parent=1 // pred_region
      %70 = dma.done [#allocation3], 256
    $region45: #{tpu_custom_call.1} parent=1 // pred_fallthru
      _
    // Predicated region
    $region46: #{tpu_custom_call.1} parent=1 // pred_check
      _
    $region47: #{tpu_custom_call.1} parent=1 // pred_check_branch
      %72 = sbr.rel (0) target = $region49
    $region48: #{tpu_custom_call.1} parent=1 // pred_region
      %73 = dma.done [#allocation6], 512
    $region49: #{tpu_custom_call.1} parent=1 // pred_fallthru
      _
    // Predicated region
    $region50: #{tpu_custom_call.1} parent=1 // pred_check
      _
    $region51: #{tpu_custom_call.1} parent=1 // pred_check_branch
      %75 = sbr.rel (0) target = $region53
    $region52: #{tpu_custom_call.1} parent=1 // pred_region
      %76 = dma.done [#allocation6], 2048
    $region53: #{tpu_custom_call.1} parent=1 // pred_fallthru
      _
    %v77 = vld [vmem:[#allocation2] sm:$0x3]
    %v78 = vld [vmem:[#allocation2 + $0x2] sm:$0x3]
    %v79 = vld [vmem:[#allocation2 + $0x4] sm:$0x3]
    %v80 = vld [vmem:[#allocation2 + $0x6] sm:$0x3]
    %v81 = vld [vmem:[#allocation2 + $0x8] sm:$0x3]
    %v82 = vld [vmem:[#allocation2 + $0xa] sm:$0x3]
    %v83 = vld [vmem:[#allocation2 + $0xc] sm:$0x3]
    %v84 = vld [vmem:[#allocation2 + $0xe] sm:$0x3]
    %vm85 = vcmask 1041408
    %v86 = vsel %vm85, %v77, -inf
    %v87 = vsel %vm85, %v78, -inf
    %v88 = vsel %vm85, %v79, -inf
    %v89 = vsel %vm85, %v80, -inf
    %v90 = vsel %vm85, %v81, -inf
    %v91 = vmax.f32 %v86, %v90
    %v92 = vsel %vm85, %v82, -inf
    %v93 = vmax.f32 %v87, %v92
    %v94 = vsel %vm85, %v83, -inf
    %v95 = vmax.f32 %v88, %v94
    %v96 = vsel %vm85, %v84, -inf
    %v97 = vmax.f32 %v89, %v96
    %v98 = vmax.f32 %v91, %v93
    %v99 = vmax.f32 %v95, %v97
    %v100 = vmax.f32 %v98, %v99
    %v101 = vld [vmem:[%s1] sm:$0x3]
    %v102 = vld [vmem:[#allocation5] sm:$0xff]
    %v103 = vld [vmem:[#allocation5 + $0x8] sm:$0xff]
    %v104 = vld [vmem:[#allocation5 + $0x10] sm:$0xff]
    %v105 = vld [vmem:[#allocation5 + $0x18] sm:$0xff]
    %v106 = vld [vmem:[%s3] sm:$0x1]
    %v108 = vlaneseq
    %v109 = vshrl.u32 %v108, 7
    %v110 = vsub.s32 0, %v109
    %v111 = vrot.slane %v106, %v110
    %vm113 = vcmask 261120
    %v115 = vsel %vm113, %v101, 0
    %117 = vmatprep.subr.mxu0 0.0
    %118 = vmatpush1.msra.mxu0 %v102
    %119 = vmatprep.subr.mxu0 0.0
    %120 = vmatpush1.msra.mxu0 %v103
    %121 = vmatprep.subr.mxu0 0.0
    %122 = vmatpush1.msra.mxu0 %v104
    %123 = vmatprep.subr.mxu0 0.0
    %124 = vmatpush1.msra.mxu0 %v105
    %125 = vmatprep.subr.mxu0 0.0
    %126 = vmatpush1.msra.mxu0 0.0
    %127 = vmatprep.subr.mxu0 0.0
    %128 = vmatpush1.msra.mxu0 0.0
    %129 = vmatprep.subr.mxu0 0.0
    %130 = vmatpush1.msra.mxu0 0.0
    %131 = vmatprep.subr.mxu0 0.0
    %132 = vmatpush1.msra.mxu0 0.0
    %133 = vmatprep.subr.mxu0 0.0
    %134 = vmatpush1.msra.mxu0 0.0
    %135 = vmatprep.subr.mxu0 0.0
    %136 = vmatpush1.msra.mxu0 0.0
    %137 = vmatprep.subr.mxu0 0.0
    %138 = vmatpush1.msra.mxu0 0.0
    %139 = vmatprep.subr.mxu0 0.0
    %140 = vmatpush1.msra.mxu0 0.0
    %141 = vmatprep.subr.mxu0 0.0
    %142 = vmatpush1.msra.mxu0 0.0
    %143 = vmatprep.subr.mxu0 0.0
    %144 = vmatpush1.msra.mxu0 0.0
    %145 = vmatprep.subr.mxu0 0.0
    %146 = vmatpush1.msra.mxu0 0.0
    %147 = vmatprep.subr.mxu0 0.0
    %148 = vmatpush1.msra.mxu0 0.0
    %149 = vmatprep.subr.mxu0 0.0
    %150 = vmatpush1.msra.mxu0 0.0
    %151 = vmatprep.subr.mxu0 0.0
    %152 = vmatpush1.msra.mxu0 0.0
    %153 = vmatprep.subr.mxu0 0.0
    %154 = vmatpush1.msra.mxu0 0.0
    %155 = vmatprep.subr.mxu0 0.0
    %156 = vmatpush1.msra.mxu0 0.0
    %157 = vmatprep.subr.mxu0 0.0
    %158 = vmatpush1.msra.mxu0 0.0
    %159 = vmatprep.subr.mxu0 0.0
    %160 = vmatpush1.msra.mxu0 0.0
    %161 = vmatprep.subr.mxu0 0.0
    %162 = vmatpush1.msra.mxu0 0.0
    %163 = vmatprep.subr.mxu0 0.0
    %164 = vmatpush1.msra.mxu0 0.0
    %165 = vmatprep.subr.mxu0 0.0
    %166 = vmatpush1.msra.mxu0 0.0
    %167 = vmatprep.subr.mxu0 0.0
    %168 = vmatpush1.msra.mxu0 0.0
    %169 = vmatprep.subr.mxu0 0.0
    %170 = vmatpush1.msra.mxu0 0.0
    %171 = vmatprep.subr.mxu0 0.0
    %172 = vmatpush1.msra.mxu0 0.0
    %173 = vmatprep.subr.mxu0 0.0
    %174 = vmatpush1.msra.mxu0 0.0
    %175 = vmatprep.subr.mxu0 0.0
    %176 = vmatpush1.msra.mxu0 0.0
    %177 = vmatprep.subr.mxu0 0.0
    %178 = vmatpush1.msra.mxu0 0.0
    %179 = vmatprep.subr.mxu0 0.0
    %180 = vmatpush1.msra.mxu0 0.0
    %181 = vmatprep.mubr.f32.mxu0 0.0
    %182 = vmatmul.mubr.f32.gmra.mrb[0].mxu0 %v115
    %v183 = vpop.f32.mrb[0].mxu0
    %v184 = vadd.f32 %v111, %v183
    %v185 = vpop.f32.mrb[0].mxu0
    %186 = vdwg.mxu0
    %v187 = vmul.f32 %v184, 0.5
    %v188 = vmul.f32 %v184, %v184
    %v189 = vmul.f32 %v188, %v184
    %v190 = vmul.f32 %v189, 0.044715
    %v191 = vadd.f32 %v184, %v190
    %v192 = vmul.f32 %v191, 0.7978846
    %v193 = vtanh.pop %v192
    %v194 = vadd.f32 %v193, 1.0
    %v195 = vmul.f32 %v187, %v194
    %v196 = vld [vmem:[#allocation7] sm:$0xff]
    %v197 = vld [vmem:[#allocation7 + $0x8] sm:$0xff]
    %v198 = vld [vmem:[#allocation7 + $0x10] sm:$0xff]
    %v199 = vld [vmem:[#allocation7 + $0x18] sm:$0xff]
    %v200 = vld [vmem:[#allocation7 + $0x20] sm:$0xff]
    %v201 = vld [vmem:[#allocation7 + $0x28] sm:$0xff]
    %v202 = vld [vmem:[#allocation7 + $0x30] sm:$0xff]
    %v203 = vld [vmem:[#allocation7 + $0x38] sm:$0xff]
    %v204 = vld [vmem:[#allocation7 + $0x40] sm:$0xff]
    %v205 = vld [vmem:[#allocation7 + $0x48] sm:$0xff]
    %v206 = vld [vmem:[#allocation7 + $0x50] sm:$0xff]
    %v207 = vld [vmem:[#allocation7 + $0x58] sm:$0xff]
    %v208 = vld [vmem:[#allocation7 + $0x60] sm:$0xff]
    %v209 = vld [vmem:[#allocation7 + $0x68] sm:$0xff]
    %v210 = vld [vmem:[#allocation7 + $0x70] sm:$0xff]
    %v211 = vld [vmem:[#allocation7 + $0x78] sm:$0xff]
    %v212 = vld [vmem:[%s5] sm:$0x1]
    %v214 = vlaneseq
    %v215 = vshrl.u32 %v214, 7
    %v216 = vsub.s32 0, %v215
    %v217 = vrot.slane %v212, %v216
    %219 = vmatprep.subr.mxu0 0.0
    %220 = vmatpush1.msra.mxu0 %v196
    %221 = vmatprep.subr.mxu0 0.0
    %222 = vmatpush1.msra.mxu0 %v197
    %223 = vmatprep.subr.mxu0 0.0
    %224 = vmatpush1.msra.mxu0 %v198
    %225 = vmatprep.subr.mxu0 0.0
    %226 = vmatpush1.msra.mxu0 %v199
    %227 = vmatprep.subr.mxu0 0.0
    %228 = vmatpush1.msra.mxu0 %v200
    %229 = vmatprep.subr.mxu0 0.0
    %230 = vmatpush1.msra.mxu0 %v201
    %231 = vmatprep.subr.mxu0 0.0
    %232 = vmatpush1.msra.mxu0 %v202
    %233 = vmatprep.subr.mxu0 0.0
    %234 = vmatpush1.msra.mxu0 %v203
    %235 = vmatprep.subr.mxu0 0.0
    %236 = vmatpush1.msra.mxu0 %v204
    %237 = vmatprep.subr.mxu0 0.0
    %238 = vmatpush1.msra.mxu0 %v205
    %239 = vmatprep.subr.mxu0 0.0
    %240 = vmatpush1.msra.mxu0 %v206
    %241 = vmatprep.subr.mxu0 0.0
    %242 = vmatpush1.msra.mxu0 %v207
    %243 = vmatprep.subr.mxu0 0.0
    %244 = vmatpush1.msra.mxu0 %v208
    %245 = vmatprep.subr.mxu0 0.0
    %246 = vmatpush1.msra.mxu0 %v209
    %247 = vmatprep.subr.mxu0 0.0
    %248 = vmatpush1.msra.mxu0 %v210
    %249 = vmatprep.subr.mxu0 0.0
    %250 = vmatpush1.msra.mxu0 %v211
    %251 = vmatprep.subr.mxu0 0.0
    %252 = vmatpush1.msra.mxu0 0.0
    %253 = vmatprep.subr.mxu0 0.0
    %254 = vmatpush1.msra.mxu0 0.0
    %255 = vmatprep.subr.mxu0 0.0
    %256 = vmatpush1.msra.mxu0 0.0
    %257 = vmatprep.subr.mxu0 0.0
    %258 = vmatpush1.msra.mxu0 0.0
    %259 = vmatprep.subr.mxu0 0.0
    %260 = vmatpush1.msra.mxu0 0.0
    %261 = vmatprep.subr.mxu0 0.0
    %262 = vmatpush1.msra.mxu0 0.0
    %263 = vmatprep.subr.mxu0 0.0
    %264 = vmatpush1.msra.mxu0 0.0
    %265 = vmatprep.subr.mxu0 0.0
    %266 = vmatpush1.msra.mxu0 0.0
    %267 = vmatprep.subr.mxu0 0.0
    %268 = vmatpush1.msra.mxu0 0.0
    %269 = vmatprep.subr.mxu0 0.0
    %270 = vmatpush1.msra.mxu0 0.0
    %271 = vmatprep.subr.mxu0 0.0
    %272 = vmatpush1.msra.mxu0 0.0
    %273 = vmatprep.subr.mxu0 0.0
    %274 = vmatpush1.msra.mxu0 0.0
    %275 = vmatprep.subr.mxu0 0.0
    %276 = vmatpush1.msra.mxu0 0.0
    %277 = vmatprep.subr.mxu0 0.0
    %278 = vmatpush1.msra.mxu0 0.0
    %279 = vmatprep.subr.mxu0 0.0
    %280 = vmatpush1.msra.mxu0 0.0
    %281 = vmatprep.subr.mxu0 0.0
    %282 = vmatpush1.msra.mxu0 0.0
    %283 = vmatprep.mubr.f32.mxu0 0.0
    %284 = vmatmul.mubr.f32.gmra.mrb[0].mxu0 %v195
    %v285 = vpop.f32.mrb[0].mxu0
    %v286 = vadd.f32 %v217, %v285
    %v287 = vpop.f32.mrb[0].mxu0
    %288 = vdwg.mxu0
    %v289 = vsel %vm85, %v100, 0.0
    %290 = vadd.xlane.f32.xlu0 %v289
    %v291 = vpop.xlane.xlu0 %290
    %v292 = vsel %vm85, %v286, 0.0
    %293 = vadd.xlane.f32.xlu0 %v292
    %v294 = vpop.xlane.xlu0 %293
    %v295 = vmul.f32 %v100, %v100
    %v296 = vsel %vm85, %v295, 0.0
    %297 = vadd.xlane.f32.xlu0 %v296
    %v298 = vpop.xlane.xlu0 %297
    %v299 = vmul.f32 %v286, %v286
    %v300 = vsel %vm85, %v299, 0.0
    %301 = vadd.xlane.f32.xlu0 %v300
    %v302 = vpop.xlane.xlu0 %301
    %v303 = vadd.f32 %v291, %v294
    %v304 = vmul.f32 %v303, 0.00390625
    %v305 = vadd.f32 %v298, %v302
    %v306 = vmul.f32 %v305, 0.00390625
    %v307 = vmul.f32 %v304, %v304
    %v308 = vsub.f32 %v306, %v307
    %v309 = vadd.f32 %v308, 1e-05
    %v310 = vrsqrt.pop %v309
    %v311 = vsub.f32 %v100, %v304
    %v312 = vmul.f32 %v311, %v310
    %v313 = vld [vmem:[%s6] sm:$0x1]
    %v315 = vlaneseq
    %v316 = vshrl.u32 %v315, 7
    %v317 = vsub.s32 0, %v316
    %v318 = vrot.slane %v313, %v317
    %v320 = vmul.f32 %v312, %v318
    %v321 = vld [vmem:[%s8] sm:$0x1]
    %v323 = vlaneseq
    %v324 = vshrl.u32 %v323, 7
    %v325 = vsub.s32 0, %v324
    %v326 = vrot.slane %v321, %v325
    %v328 = vadd.f32 %v320, %v326
    %329 = vst [vmem:[#allocation8] sm:$0x3] %v328
    %v330 = vsub.f32 %v286, %v304
    %v331 = vmul.f32 %v330, %v310
    %v332 = vld [vmem:[%s7] sm:$0x1]
    %v334 = vlaneseq
    %v335 = vshrl.u32 %v334, 7
    %v336 = vsub.s32 0, %v335
    %v337 = vrot.slane %v332, %v336
    %v339 = vmul.f32 %v331, %v337
    %v340 = vld [vmem:[%s9] sm:$0x1]
    %v342 = vlaneseq
    %v343 = vshrl.u32 %v342, 7
    %v344 = vsub.s32 0, %v343
    %v345 = vrot.slane %v340, %v344
    %v347 = vadd.f32 %v339, %v345
    %348 = vst [vmem:[#allocation8 + $0x2] sm:$0x3] %v347
    // Predicated region
    $region54: #{tpu_custom_call.1} parent=1 // pred_check
      _
    $region55: #{tpu_custom_call.1} parent=1 // pred_check_branch
      %350 = sbr.rel (0) target = $region57
    $region56: #{tpu_custom_call.1} parent=1 // pred_region
      %s352 = ssub.s32 64, 64
      %353 = vsyncadd [#allocation4], %s352
      %s355 = sshll.u32 [#allocation8], 4
      %s356 = int_to_ptr.vmem [resolvable:$true] %s355
      %358 = dma.vmem_to_hbm [thread:$0]  %s356, 64, %s10, [#allocation4]
    $region57: #{tpu_custom_call.1} parent=1 // pred_fallthru
      _
    // Predicated region
    $region58: #{tpu_custom_call.1} parent=1 // pred_check
      _
    $region59: #{tpu_custom_call.1} parent=1 // pred_check_branch
      %360 = sbr.rel (0) target = $region61
    $region60: #{tpu_custom_call.1} parent=1 // pred_region
      %361 = dma.done [#allocation4], 64
    $region61: #{tpu_custom_call.1} parent=1 // pred_fallthru
      _
    %362 = vsyncpa [#allocation3], 1
    %363 = vsyncpa [#allocation6], 1
    %364 = vsyncpa [#allocation4], 1

</llo_original>
